<compile_context>
chip_gen: v7x
topology: tpu7x:2x2x1
jax: 0.10.0
libtpu: 0.0.40
codegen_flags: <defaults>
</compile_context>

<pallas_src>
import jax
import jax.numpy as jnp
from jax.experimental import pallas as pl
from jax.experimental.pallas import tpu as pltpu

_LANE = 128
_SUBLANE = 8
_MAX_BATCH_TILE = 512
_SQRT_HALF = 0.7071067811865476  # 1/sqrt(2)


def _gelu_exact(x):
    # transformers' ACT2FN['gelu'] == erf-based GELU (matches torch.nn.GELU default)
    return 0.5 * x * (1.0 + jax.lax.erf(x * _SQRT_HALF))


def _fused_trans_kernel(x_ref, w_ref, b_ref, out_ref):
    # One fused matmul per batch tile: [tb, S1p] @ [S1p, Np] -> [tb, Np]
    # (f32 accumulate on MXU), bias add + exact GELU epilogue on the VPU/EUP,
    # then a single lane-dense output store.
    acc = jnp.dot(x_ref[...], w_ref[...], preferred_element_type=jnp.float32)
    acc = acc + b_ref[...]              # (tb, Np) + (1, Np) broadcast
    out_ref[...] = _gelu_exact(acc).astype(out_ref.dtype)
    # TODO(synk): nn.Dropout(0.1) in training mode would need pltpu.prng_seed /
    # pltpu.prng_random_bits; here it is the identity (eval / inference semantics).


def _round_up(n, m):
    return (n + m - 1) // m * m


@jax.jit
def model_trans_forward(x, w_pos, b_pos, w_neg, b_neg):
    """x: [B, S1]; w_*: [S1, S2] (pre-transposed vs. PyTorch); b_*: [S2].

    Returns (pos, neg), each [B, S2].
    """
    B, S1 = x.shape
    S2 = w_pos.shape[1]
    n_fused = 2 * S2

    # Hardware-aligned padded extents.
    n_pad = _round_up(n_fused, _LANE)          # fused output dim (lanes)
    s1_pad = _round_up(S1, _LANE)              # contraction dim (lanes for x)
    b_pad = _round_up(B, _SUBLANE)             # batch dim (sublanes)
    tb = min(b_pad, _MAX_BATCH_TILE)           # batch tile; b_pad % tb may be 0 only if divides
    while b_pad % tb != 0:                     # keep tiles exact (tiny loop; b_pad small multiples of 8)
        tb -= _SUBLANE
    grid = (b_pad // tb,)

    # Fuse the two linear layers into one operand; zero-pad to aligned tiles.
    w_cat = jnp.concatenate([w_pos, w_neg], axis=1)            # [S1, 2*S2]
    b_cat = jnp.concatenate([b_pos, b_neg], axis=0)[None, :]   # [1, 2*S2]
    x_p = jnp.pad(x, ((0, b_pad - B), (0, s1_pad - S1)))
    w_p = jnp.pad(w_cat, ((0, s1_pad - S1), (0, n_pad - n_fused)))
    b_p = jnp.pad(b_cat, ((0, 0), (0, n_pad - n_fused)))

    out = pl.pallas_call(
        _fused_trans_kernel,
        out_shape=jax.ShapeDtypeStruct((b_pad, n_pad), jnp.float32),
        grid=grid,
        in_specs=[
            pl.BlockSpec((tb, s1_pad), lambda i: (i, 0)),
            pl.BlockSpec((s1_pad, n_pad), lambda i: (0, 0)),
            pl.BlockSpec((1, n_pad), lambda i: (0, 0)),
        ],
        out_specs=pl.BlockSpec((tb, n_pad), lambda i: (i, 0)),
        compiler_params=pltpu.CompilerParams(
            dimension_semantics=("parallel",),
        ),
    )(x_p, w_p, b_p)

    pos = out[:B, :S2]
    neg = out[:B, S2:n_fused]
    return pos, neg


def init_linear_params(key, in_features, out_features):
    # Deterministic nn.Linear-style init: U(-1/sqrt(in), 1/sqrt(in)).
    kw, kb = jax.random.split(key)
    bound = 1.0 / jnp.sqrt(jnp.float32(in_features))
    # PyTorch weight is [out, in]; store transposed [in, out] for the kernel.
    w = jax.random.uniform(kw, (in_features, out_features), jnp.float32,
                           minval=-bound, maxval=bound)
    b = jax.random.uniform(kb, (out_features,), jnp.float32,
                           minval=-bound, maxval=bound)
    return w, b


if __name__ == "__main__":
    key = jax.random.PRNGKey(0)
    k_x, k_pos, k_neg = jax.random.split(key, 3)

    batch, size1, size2 = 8, 32, 32
    x = jax.random.normal(k_x, (batch, size1), jnp.float32)
    w_pos, b_pos = init_linear_params(k_pos, size1, size2)
    w_neg, b_neg = init_linear_params(k_neg, size1, size2)

    pos_out, neg_out = model_trans_forward(x, w_pos, b_pos, w_neg, b_neg)
    jax.block_until_ready((pos_out, neg_out))

    # Pure-JAX reference check.
    def ref_gelu(v):
        return 0.5 * v * (1.0 + jax.lax.erf(v / jnp.sqrt(2.0)))
    ref_pos = ref_gelu(x @ w_pos + b_pos)
    ref_neg = ref_gelu(x @ w_neg + b_neg)
    assert pos_out.shape == (batch, size2) and neg_out.shape == (batch, size2)
    assert jnp.allclose(pos_out, ref_pos, atol=1e-5, rtol=1e-5)
    assert jnp.allclose(neg_out, ref_neg, atol=1e-5, rtol=1e-5)

    print("KERNEL_OK")
</pallas_src>

<mosaic_0001>
module attributes {stable_mosaic.version = 11 : i64} {
  func.func @_fused_trans_kernel(%arg0: i32, %arg1: memref<8x128xf32, #tpu.memory_space<vmem>>, %arg2: memref<128x128xf32, #tpu.memory_space<vmem>>, %arg3: memref<1x128xf32, #tpu.memory_space<vmem>>, %arg4: memref<8x128xf32, #tpu.memory_space<vmem>>) attributes {dimension_semantics = [#tpu.dimension_semantics<parallel>], iteration_bounds = array<i64: 1>, scalar_prefetch = 0 : i64, scratch_operands = 0 : i64, tpu.core_type = #tpu.core_type<tc>, window_params = [{transform_indices = @transform_0, window_bounds = array<i64: 8, 128>}, {pipeline_mode = #tpu.pipeline_mode<synchronous>, transform_indices = @transform_1, window_bounds = array<i64: 128, 128>}, {pipeline_mode = #tpu.pipeline_mode<synchronous>, transform_indices = @transform_2, window_bounds = array<i64: 1, 128>}, {transform_indices = @transform_3, window_bounds = array<i64: 8, 128>}]} {
    %c0 = arith.constant 0 : index
    %c0_0 = arith.constant 0 : index
    %0 = vector.load %arg1[%c0, %c0_0] : memref<8x128xf32, #tpu.memory_space<vmem>>, vector<8x128xf32>
    %c0_1 = arith.constant 0 : index
    %c0_2 = arith.constant 0 : index
    %1 = vector.load %arg2[%c0_1, %c0_2] : memref<128x128xf32, #tpu.memory_space<vmem>>, vector<128x128xf32>
    %cst = arith.constant dense<0.000000e+00> : vector<8x128xf32>
    %2 = tpu.matmul %0, %1, %cst {dimension_numbers = #tpu.dot_dimension_numbers<[1], [0], [0], [1], [0, 0, 1, 1], [], []>} : vector<8x128xf32>, vector<128x128xf32>, vector<8x128xf32> -> vector<8x128xf32>
    %c0_3 = arith.constant 0 : index
    %c0_4 = arith.constant 0 : index
    %3 = vector.load %arg3[%c0_3, %c0_4] : memref<1x128xf32, #tpu.memory_space<vmem>>, vector<1x128xf32>
    %4 = vector.broadcast %3 : vector<1x128xf32> to vector<8x128xf32>
    %5 = arith.addf %2, %4 : vector<8x128xf32>
    %cst_5 = arith.constant 5.000000e-01 : f32
    %6 = vector.broadcast %cst_5 : f32 to vector<8x128xf32>
    %7 = arith.mulf %6, %5 : vector<8x128xf32>
    %cst_6 = arith.constant 0.707106769 : f32
    %8 = vector.broadcast %cst_6 : f32 to vector<8x128xf32>
    %9 = arith.mulf %5, %8 : vector<8x128xf32>
    %10 = math.erf %9 : vector<8x128xf32>
    %cst_7 = arith.constant 1.000000e+00 : f32
    %11 = vector.broadcast %cst_7 : f32 to vector<8x128xf32>
    %12 = arith.addf %11, %10 : vector<8x128xf32>
    %13 = arith.mulf %7, %12 : vector<8x128xf32>
    %c0_8 = arith.constant 0 : index
    %c0_9 = arith.constant 0 : index
    %14 = vector.load %arg4[%c0_8, %c0_9] : memref<8x128xf32, #tpu.memory_space<vmem>>, vector<8x128xf32>
    tpu.vector_store %arg4[%c0_8, %c0_9], %13 {strides = array<i32>} : memref<8x128xf32, #tpu.memory_space<vmem>>, vector<8x128xf32>,
    return
  }
  func.func @transform_0(%arg0: i32) -> (i32, i32) {
    %c0_i32 = arith.constant 0 : i32
    %c0_i32_0 = arith.constant 0 : i32
    return %arg0, %c0_i32 : i32, i32
  }
  func.func @transform_1(%arg0: i32) -> (i32, i32) {
    %c0_i32 = arith.constant 0 : i32
    %c0_i32_0 = arith.constant 0 : i32
    %c0_i32_1 = arith.constant 0 : i32
    return %c0_i32, %c0_i32_0 : i32, i32
  }
  func.func @transform_2(%arg0: i32) -> (i32, i32) {
    %c0_i32 = arith.constant 0 : i32
    %c0_i32_0 = arith.constant 0 : i32
    %c0_i32_1 = arith.constant 0 : i32
    return %c0_i32, %c0_i32_0 : i32, i32
  }
  func.func @transform_3(%arg0: i32) -> (i32, i32) {
    %c0_i32 = arith.constant 0 : i32
    %c0_i32_0 = arith.constant 0 : i32
    return %arg0, %c0_i32 : i32, i32
  }
}

</mosaic_0001>

<llo_original>
// kernel: model_trans_forward.1
$region0: #{model_trans_forward.1}
  #allocation0 [shape = 'u32[]', space=smem, size = 0x4, offset = 0x4, fixed_abs, tag = 'smem constant byte address 0x4 - core index']
  #allocation1 [shape = 'u32[144,128]{1,0:T(1,128)}', space=vmem, size = 0x12000, scoped, tag = 'internal scratch']
  %s0 = inlined_call_operand.vmem [shape: f32[8,128], index: 0, kind: input, shape index: {}]
  %s1 = inlined_call_operand.vmem [shape: f32[128,128], index: 1, kind: input, shape index: {}]
  %s2 = inlined_call_operand.vmem [shape: f32[1,128], index: 2, kind: input, shape index: {}]
  %s3 = inlined_call_operand.vmem [shape: f32[8,128], index: 3, kind: output, shape index: {}]
  %s4 = sld [smem:[#allocation0]]
  $region22: #{model_trans_forward.1} parent=0
    _
  %s6 = ssub.s32 1, %s4
  %s7 = scalar_select 0, %s6, %s4
  // Predicated region
  $region2: #{model_trans_forward.1} parent=0 // pred_check
    _
  $region3: #{model_trans_forward.1} parent=0 // pred_check_branch
    %9 = sbr.rel (0) target = $region5
  $region4: #{model_trans_forward.1} parent=0 // pred_region
    _
  $region5: #{model_trans_forward.1} parent=0 // pred_fallthru
    _
  // Predicated region
  $region6: #{model_trans_forward.1} parent=0 // pred_check
    _
  $region7: #{model_trans_forward.1} parent=0 // pred_check_branch
    %11 = sbr.rel (0) target = $region9
  $region8: #{model_trans_forward.1} parent=0 // pred_region
    _
  $region9: #{model_trans_forward.1} parent=0 // pred_fallthru
    _
  // Predicated region
  $region10: #{model_trans_forward.1} parent=0 // pred_check
    _
  $region11: #{model_trans_forward.1} parent=0 // pred_check_branch
    %13 = sbr.rel (0) target = $region13
  $region12: #{model_trans_forward.1} parent=0 // pred_region
    _
  $region13: #{model_trans_forward.1} parent=0 // pred_fallthru
    _
  %v14 = vld [vmem:[%s0] sm:$0xff]
  %v15 = vld [vmem:[%s1] sm:$0xff]
  %v16 = vld [vmem:[%s1 + $0x8] sm:$0xff]
  %v17 = vld [vmem:[%s1 + $0x10] sm:$0xff]
  %v18 = vld [vmem:[%s1 + $0x18] sm:$0xff]
  %v19 = vld [vmem:[%s1 + $0x20] sm:$0xff]
  %v20 = vld [vmem:[%s1 + $0x28] sm:$0xff]
  %v21 = vld [vmem:[%s1 + $0x30] sm:$0xff]
  %v22 = vld [vmem:[%s1 + $0x38] sm:$0xff]
  %v23 = vld [vmem:[%s1 + $0x40] sm:$0xff]
  %v24 = vld [vmem:[%s1 + $0x48] sm:$0xff]
  %v25 = vld [vmem:[%s1 + $0x50] sm:$0xff]
  %v26 = vld [vmem:[%s1 + $0x58] sm:$0xff]
  %v27 = vld [vmem:[%s1 + $0x60] sm:$0xff]
  %v28 = vld [vmem:[%s1 + $0x68] sm:$0xff]
  %v29 = vld [vmem:[%s1 + $0x70] sm:$0xff]
  %v30 = vld [vmem:[%s1 + $0x78] sm:$0xff]
  %v31 = vld [vmem:[%s2] sm:$0x1]
  %v33 = vlaneseq
  %v34 = vshrl.u32 %v33, 7
  %v35 = vsub.s32 0, %v34
  %v36 = vrot.slane %v31, %v35
  %38 = vmatprep.subr.mxu0 0.0
  %39 = vmatpush1.msra.mxu0 %v15
  %40 = vmatprep.subr.mxu0 0.0
  %41 = vmatpush1.msra.mxu0 %v16
  %42 = vmatprep.subr.mxu0 0.0
  %43 = vmatpush1.msra.mxu0 %v17
  %44 = vmatprep.subr.mxu0 0.0
  %45 = vmatpush1.msra.mxu0 %v18
  %46 = vmatprep.subr.mxu0 0.0
  %47 = vmatpush1.msra.mxu0 %v19
  %48 = vmatprep.subr.mxu0 0.0
  %49 = vmatpush1.msra.mxu0 %v20
  %50 = vmatprep.subr.mxu0 0.0
  %51 = vmatpush1.msra.mxu0 %v21
  %52 = vmatprep.subr.mxu0 0.0
  %53 = vmatpush1.msra.mxu0 %v22
  %54 = vmatprep.subr.mxu0 0.0
  %55 = vmatpush1.msra.mxu0 %v23
  %56 = vmatprep.subr.mxu0 0.0
  %57 = vmatpush1.msra.mxu0 %v24
  %58 = vmatprep.subr.mxu0 0.0
  %59 = vmatpush1.msra.mxu0 %v25
  %60 = vmatprep.subr.mxu0 0.0
  %61 = vmatpush1.msra.mxu0 %v26
  %62 = vmatprep.subr.mxu0 0.0
  %63 = vmatpush1.msra.mxu0 %v27
  %64 = vmatprep.subr.mxu0 0.0
  %65 = vmatpush1.msra.mxu0 %v28
  %66 = vmatprep.subr.mxu0 0.0
  %67 = vmatpush1.msra.mxu0 %v29
  %68 = vmatprep.subr.mxu0 0.0
  %69 = vmatpush1.msra.mxu0 %v30
  %70 = vmatprep.subr.mxu0 0.0
  %71 = vmatpush1.msra.mxu0 0.0
  %72 = vmatprep.subr.mxu0 0.0
  %73 = vmatpush1.msra.mxu0 0.0
  %74 = vmatprep.subr.mxu0 0.0
  %75 = vmatpush1.msra.mxu0 0.0
  %76 = vmatprep.subr.mxu0 0.0
  %77 = vmatpush1.msra.mxu0 0.0
  %78 = vmatprep.subr.mxu0 0.0
  %79 = vmatpush1.msra.mxu0 0.0
  %80 = vmatprep.subr.mxu0 0.0
  %81 = vmatpush1.msra.mxu0 0.0
  %82 = vmatprep.subr.mxu0 0.0
  %83 = vmatpush1.msra.mxu0 0.0
  %84 = vmatprep.subr.mxu0 0.0
  %85 = vmatpush1.msra.mxu0 0.0
  %86 = vmatprep.subr.mxu0 0.0
  %87 = vmatpush1.msra.mxu0 0.0
  %88 = vmatprep.subr.mxu0 0.0
  %89 = vmatpush1.msra.mxu0 0.0
  %90 = vmatprep.subr.mxu0 0.0
  %91 = vmatpush1.msra.mxu0 0.0
  %92 = vmatprep.subr.mxu0 0.0
  %93 = vmatpush1.msra.mxu0 0.0
  %94 = vmatprep.subr.mxu0 0.0
  %95 = vmatpush1.msra.mxu0 0.0
  %96 = vmatprep.subr.mxu0 0.0
  %97 = vmatpush1.msra.mxu0 0.0
  %98 = vmatprep.subr.mxu0 0.0
  %99 = vmatpush1.msra.mxu0 0.0
  %100 = vmatprep.subr.mxu0 0.0
  %101 = vmatpush1.msra.mxu0 0.0
  %102 = vmatprep.mubr.f32.mxu0 0.0
  %103 = vmatmul.mubr.f32.gmra.mrb[0].mxu0 %v14
  %v104 = vpop.f32.mrb[0].mxu0
  %v105 = vadd.f32 %v36, %v104
  %v106 = vpop.f32.mrb[0].mxu0
  %107 = vdwg.mxu0
  %v108 = vmul.f32 %v105, 0.5
  %v109 = vmul.f32 %v105, 0.70710677
  %v110 = verf.f32.pop %v109
  %v111 = vadd.f32 %v110, 1.0
  %v112 = vmul.f32 %v108, %v111
  %113 = vst [vmem:[%s3] sm:$0xff] %v112
  // Predicated region
  $region14: #{model_trans_forward.1} parent=0 // pred_check
    _
  $region15: #{model_trans_forward.1} parent=0 // pred_check_branch
    %115 = sbr.rel (0) target = $region17
  $region16: #{model_trans_forward.1} parent=0 // pred_region
    _
  $region17: #{model_trans_forward.1} parent=0 // pred_fallthru
    _
  // Predicated region
  $region18: #{model_trans_forward.1} parent=0 // pred_check
    _
  $region19: #{model_trans_forward.1} parent=0 // pred_check_branch
    %117 = sbr.rel (0) target = $region21
  $region20: #{model_trans_forward.1} parent=0 // pred_region
    _
  $region21: #{model_trans_forward.1} parent=0 // pred_fallthru
    _

</llo_original>
